<compile_context>
chip_gen: v6e
topology: v6e:2x2x1
jax: 0.10.0
libtpu: 0.0.40
codegen_flags: <defaults>
</compile_context>

<pallas_src>
from functools import partial

import jax
import jax.numpy as jnp
from jax.experimental import pallas as pl
from jax.experimental.pallas import tpu as pltpu


def _hash_keep_mask(shape, seed_u32, tile_u32):
    """Fair-coin keep mask via a murmur3-style integer hash of
    (seed, grid tile, element index).  Pure VPU integer math so it lowers on
    TPU hardware and in interpret mode alike; thresholds on the top bit."""
    rows = jax.lax.broadcasted_iota(jnp.uint32, shape, 0)
    cols = jax.lax.broadcasted_iota(jnp.uint32, shape, 1)
    h = rows * jnp.uint32(shape[1]) + cols
    h = h + seed_u32 * jnp.uint32(0x9E3779B1) + tile_u32 * jnp.uint32(0x85EBCA77)
    h = h ^ (h >> 16)
    h = h * jnp.uint32(0x7FEB352D)
    h = h ^ (h >> 15)
    h = h * jnp.uint32(0x846CA68B)
    h = h ^ (h >> 16)
    return (h & jnp.uint32(0x80000000)) != 0


def encoder_head_kernel(seed_ref, x_ref, w_ref, b_ref, o_ref, *, apply_dropout):
    # seed_ref: SMEM (1,) i32            -- scalar prefetch
    # x_ref:    VMEM (TILE_N, C, HW)     -- trunk features, NATIVE channels-first layout (bf16)
    # w_ref:    VMEM (C, E_pad) bf16     -- fc weight, pre-transposed, lane-padded E, resident
    # b_ref:    VMEM (1, E_pad) f32      -- fc bias, resident
    # o_ref:    VMEM (TILE_N, E_pad) f32
    x = x_ref[...].astype(jnp.float32)                # upcast before reduction (v5e: no bf16 VPU)
    pooled = jnp.mean(x, axis=-1)                     # (TILE_N, C) global avg pool (XLU lane reduce)
    feats = jnp.dot(pooled.astype(w_ref.dtype), w_ref[...],
                    preferred_element_type=jnp.float32)   # (TILE_N, E_pad) bf16 MXU matmul, f32 acc
    feats = jnp.maximum(feats + b_ref[...], 0.0)      # bias + ReLU

    if apply_dropout:
        # Dropout(p=0.5), training semantics: fair coin per element, kept values * 2.
        # Mix the grid tile index into the seed so batch tiles get independent masks.
        seed_u = seed_ref[0].astype(jnp.uint32)
        tile_u = pl.program_id(0).astype(jnp.uint32)
        keep = _hash_keep_mask(feats.shape, seed_u, tile_u)
        feats = jnp.where(keep, feats * 2.0, 0.0)

    o_ref[...] = feats


def _vmem_budget_bytes():
    """Per-core VMEM budget: physical capacity minus ~16 MiB headroom for
    compiler scratch, capped at 96 MiB (128 MiB parts) -> ~48 MiB on v7x."""
    try:
        cap = int(pltpu.get_tpu_info().vmem_capacity_bytes)
    except Exception:
        return None
    return int(min(96 * 2**20, max(cap - 16 * 2**20, 16 * 2**20)))


def _pick_tile_n(N, C, HW, x_bytes_per_elem, vmem_budget):
    """Pick the batch tile: as big as fits (x is double-buffered and should use
    about half the VMEM budget), capped at 128 (MXU M), multiple of 8, and
    split into >=2 grid steps when N allows so the parallel batch axis can
    shard across both TensorCores on v7x."""
    if N <= 8:
        return N
    per_row = C * HW * x_bytes_per_elem
    max_rows = max(8, int((vmem_budget // 2) // (2 * per_row)))
    tile = min(128, N, max_rows)
    tile = max(8, (tile // 8) * 8)
    if tile >= N and N >= 16:
        tile = max(8, ((N + 15) // 16) * 8)   # 2 tiles, each a multiple of 8
    return tile


def encoder_cnn_forward(trunk_feats_nchw, fc_weight, fc_bias, seed, *,
                        training=True, tile_n=None):
    """trunk_feats_nchw: (N, C, H, W) trunk features (any float dtype; bf16 preferred
    since the kernel streams it as-is); fc_weight: (E, C); fc_bias: (E,)."""
    N, C, H, W = trunk_feats_nchw.shape
    E = fc_weight.shape[0]
    HW = H * W

    # Native layout: just a contiguous reshape (no transpose, no extra HBM pass).
    x = trunk_feats_nchw.reshape(N, C, HW)

    vmem_limit = _vmem_budget_bytes()
    tile_budget = vmem_limit if vmem_limit is not None else 32 * 2**20

    if tile_n is None:
        tile_n = _pick_tile_n(N, C, HW, x.dtype.itemsize, tile_budget)
    else:
        tile_n = min(tile_n, N)
        if N > 8:
            tile_n = max(8, (tile_n // 8) * 8)

    n_tiles = pl.cdiv(N, tile_n)
    N_pad = n_tiles * tile_n
    if N_pad != N:
        x = jnp.pad(x, ((0, N_pad - N), (0, 0), (0, 0)))

    # Lane-dense output: pad E to a multiple of 128 (unmasked stores), slice back after.
    E_pad = ((E + 127) // 128) * 128
    w_t = fc_weight.T                                    # (C, E)
    b = fc_bias.astype(jnp.float32)
    if E_pad != E:
        w_t = jnp.pad(w_t, ((0, 0), (0, E_pad - E)))
        b = jnp.pad(b, (0, E_pad - E))
    w_t = w_t.astype(jnp.bfloat16)                       # small, resident, bf16 MXU operand
    b = b.reshape(1, E_pad)

    seed_arr = jnp.asarray([seed], dtype=jnp.int32)

    def _call(single_buffer_weights):
        def _resident_spec(shape):
            idx_map = lambda i, seed: (0,) * len(shape)
            if single_buffer_weights:
                # Constant index_map => never re-DMA'd; single buffer saves VMEM.
                return pl.BlockSpec(shape, idx_map, pipeline_mode=pl.Buffered(1))
            return pl.BlockSpec(shape, idx_map)

        return pl.pallas_call(
            partial(encoder_head_kernel, apply_dropout=training),
            out_shape=jax.ShapeDtypeStruct((N_pad, E_pad), jnp.float32),
            grid_spec=pltpu.PrefetchScalarGridSpec(
                num_scalar_prefetch=1,
                grid=(n_tiles,),
                in_specs=[
                    # x: streamed batch tiles (double-buffered by the pipeline).
                    pl.BlockSpec((tile_n, C, HW), lambda i, seed: (i, 0, 0)),
                    # fc weight / bias: VMEM-resident across the whole grid.
                    _resident_spec((C, E_pad)),
                    _resident_spec((1, E_pad)),
                ],
                out_specs=pl.BlockSpec((tile_n, E_pad), lambda i, seed: (i, 0)),
            ),
            compiler_params=pltpu.CompilerParams(
                # Batch tiles are independent -> shard across both TCs on v7x.
                dimension_semantics=("parallel",),
                vmem_limit_bytes=vmem_limit,
            ),
        )(seed_arr, x, w_t, b)

    try:
        out = _call(True)
    except Exception:
        # pipeline_mode / pl.Buffered(1) not supported on this jax version:
        # fall back to default double-buffering (correctness identical).
        out = _call(False)

    return out[:N, :E]


if __name__ == "__main__":
    # Small synthetic shapes: batch=2, trunk channels=32 (stand-in for inception's
    # 2048), spatial 8x8, embed_size=64.  Trunk features are bf16 (the dtype the
    # trunk would emit on TPU) so the kernel exercises the bf16 streaming path.
    N, C, H, W, E = 2, 32, 8, 8, 64
    key = jax.random.PRNGKey(0)
    k_img, k_w, k_b = jax.random.split(key, 3)

    images = jax.random.normal(k_img, (N, C, H, W), dtype=jnp.float32).astype(jnp.bfloat16)
    fc_weight = jax.random.normal(k_w, (E, C), dtype=jnp.float32) * (1.0 / jnp.sqrt(C))
    fc_bias = jax.random.normal(k_b, (E,), dtype=jnp.float32) * 0.01

    out = encoder_cnn_forward(images, fc_weight, fc_bias, seed=1234, training=True)
    out = jax.block_until_ready(out)

    # Pure-JAX reference in matching precision (f32 pool of bf16 features,
    # bf16 matmul with f32 accumulation).  Every kernel output element must be
    # either dropped (exact 0) or ~2x the reference (dropout p=0.5 scaling).
    pooled = images.astype(jnp.float32).reshape(N, C, H * W).mean(axis=-1)
    ref = jnp.maximum(
        jnp.dot(pooled.astype(jnp.bfloat16), fc_weight.astype(jnp.bfloat16).T,
                preferred_element_type=jnp.float32) + fc_bias, 0.0)

    tol = 1e-2 + 1e-2 * jnp.abs(2.0 * ref)
    matches_kept = jnp.abs(out - 2.0 * ref) < tol
    matches_drop = jnp.abs(out) < 1e-6
    ok = bool(jnp.all(matches_kept | matches_drop))

    # Sanity on the in-kernel PRNG: among clearly-positive reference elements,
    # the kept fraction should be roughly a fair coin.
    pos = ref > 1e-3
    n_pos = int(jnp.sum(pos))
    kept_frac = float(
        jnp.sum(jnp.where(pos, (jnp.abs(out) > 1e-6).astype(jnp.float32), 0.0)) / max(n_pos, 1))

    assert out.shape == (N, E)
    assert ok, "kernel output inconsistent with ReLU(fc(pool(x))) under dropout masking"
    assert n_pos == 0 or (0.05 < kept_frac < 0.95), f"dropout mask looks degenerate (kept={kept_frac})"

    # Eval path sanity (no dropout): deterministic match against the reference.
    out_eval = jax.block_until_ready(
        encoder_cnn_forward(images, fc_weight, fc_bias, seed=0, training=False))
    assert bool(jnp.all(jnp.abs(out_eval - ref) < 1e-2 + 1e-2 * jnp.abs(ref)))

    print("KERNEL_OK")
</pallas_src>

<mosaic_0001>
module attributes {stable_mosaic.version = 11 : i64} {
  func.func @encoder_head_kernel(%arg0: i32, %arg1: memref<1xi32, #tpu.memory_space<smem>>, %arg2: memref<2x32x64xbf16, #tpu.memory_space<vmem>>, %arg3: memref<32x128xbf16, #tpu.memory_space<vmem>>, %arg4: memref<1x128xf32, #tpu.memory_space<vmem>>, %arg5: memref<2x128xf32, #tpu.memory_space<vmem>>) attributes {dimension_semantics = [#tpu.dimension_semantics<parallel>], iteration_bounds = array<i64: 1>, scalar_prefetch = 1 : i64, scratch_operands = 0 : i64, tpu.core_type = #tpu.core_type<tc>, window_params = [{transform_indices = @transform_0, window_bounds = array<i64: 2, 32, 64>}, {pipeline_mode = #tpu.pipeline_mode<synchronous>, transform_indices = @transform_1, window_bounds = array<i64: 32, 128>}, {pipeline_mode = #tpu.pipeline_mode<synchronous>, transform_indices = @transform_2, window_bounds = array<i64: 1, 128>}, {transform_indices = @transform_3, window_bounds = array<i64: 2, 128>}]} {
    %c0 = arith.constant 0 : index
    %c0_0 = arith.constant 0 : index
    %c0_1 = arith.constant 0 : index
    %0 = vector.load %arg2[%c0, %c0_0, %c0_1] : memref<2x32x64xbf16, #tpu.memory_space<vmem>>, vector<2x32x64xbf16>
    %1 = arith.extf %0 : vector<2x32x64xbf16> to vector<2x32x64xf32>
    %cst = arith.constant dense<0.000000e+00> : vector<2x32xf32>
    %2 = vector.multi_reduction <add>, %1, %cst [2] : vector<2x32x64xf32> to vector<2x32xf32>
    %cst_2 = arith.constant 6.400000e+01 : f32
    %3 = vector.broadcast %cst_2 : f32 to vector<2x32xf32>
    %4 = arith.divf %2, %3 : vector<2x32xf32>
    %5 = arith.truncf %4 : vector<2x32xf32> to vector<2x32xbf16>
    %c0_3 = arith.constant 0 : index
    %c0_4 = arith.constant 0 : index
    %6 = vector.load %arg3[%c0_3, %c0_4] : memref<32x128xbf16, #tpu.memory_space<vmem>>, vector<32x128xbf16>
    %cst_5 = arith.constant dense<0.000000e+00> : vector<2x128xf32>
    %7 = tpu.matmul %5, %6, %cst_5 {dimension_numbers = #tpu.dot_dimension_numbers<[1], [0], [0], [1], [0, 0, 1, 1], [], []>} : vector<2x32xbf16>, vector<32x128xbf16>, vector<2x128xf32> -> vector<2x128xf32>
    %c0_6 = arith.constant 0 : index
    %c0_7 = arith.constant 0 : index
    %8 = vector.load %arg4[%c0_6, %c0_7] : memref<1x128xf32, #tpu.memory_space<vmem>>, vector<1x128xf32>
    %9 = vector.broadcast %8 : vector<1x128xf32> to vector<2x128xf32>
    %10 = arith.addf %7, %9 : vector<2x128xf32>
    %cst_8 = arith.constant 0.000000e+00 : f32
    %11 = vector.broadcast %cst_8 : f32 to vector<2x128xf32>
    %12 = arith.maximumf %10, %11 : vector<2x128xf32>
    %c0_9 = arith.constant 0 : index
    %13 = memref.load %arg1[%c0_9] : memref<1xi32, #tpu.memory_space<smem>>
    %14 = tpu.iota {dimensions = array<i32: 0>} : vector<2x128xi32>
    %15 = tpu.iota {dimensions = array<i32: 1>} : vector<2x128xi32>
    %c128_i32 = arith.constant 128 : i32
    %16 = vector.broadcast %c128_i32 : i32 to vector<2x128xi32>
    %17 = arith.muli %14, %16 : vector<2x128xi32>
    %18 = arith.addi %17, %15 : vector<2x128xi32>
    %c-1640531535_i32 = arith.constant -1640531535 : i32
    %19 = arith.muli %13, %c-1640531535_i32 : i32
    %20 = vector.broadcast %19 : i32 to vector<2x128xi32>
    %21 = arith.addi %18, %20 : vector<2x128xi32>
    %c-2048144777_i32 = arith.constant -2048144777 : i32
    %22 = arith.muli %arg0, %c-2048144777_i32 : i32
    %23 = vector.broadcast %22 : i32 to vector<2x128xi32>
    %24 = arith.addi %21, %23 : vector<2x128xi32>
    %c16_i32 = arith.constant 16 : i32
    %25 = vector.broadcast %c16_i32 : i32 to vector<2x128xi32>
    %26 = arith.shrui %24, %25 : vector<2x128xi32>
    %27 = arith.xori %24, %26 : vector<2x128xi32>
    %c2146121005_i32 = arith.constant 2146121005 : i32
    %28 = vector.broadcast %c2146121005_i32 : i32 to vector<2x128xi32>
    %29 = arith.muli %27, %28 : vector<2x128xi32>
    %c15_i32 = arith.constant 15 : i32
    %30 = vector.broadcast %c15_i32 : i32 to vector<2x128xi32>
    %31 = arith.shrui %29, %30 : vector<2x128xi32>
    %32 = arith.xori %29, %31 : vector<2x128xi32>
    %c-2073254261_i32 = arith.constant -2073254261 : i32
    %33 = vector.broadcast %c-2073254261_i32 : i32 to vector<2x128xi32>
    %34 = arith.muli %32, %33 : vector<2x128xi32>
    %c16_i32_10 = arith.constant 16 : i32
    %35 = vector.broadcast %c16_i32_10 : i32 to vector<2x128xi32>
    %36 = arith.shrui %34, %35 : vector<2x128xi32>
    %37 = arith.xori %34, %36 : vector<2x128xi32>
    %c-2147483648_i32 = arith.constant -2147483648 : i32
    %38 = vector.broadcast %c-2147483648_i32 : i32 to vector<2x128xi32>
    %39 = arith.andi %37, %38 : vector<2x128xi32>
    %c0_i32 = arith.constant 0 : i32
    %40 = vector.broadcast %c0_i32 : i32 to vector<2x128xi32>
    %41 = arith.cmpi ne, %39, %40 : vector<2x128xi32>
    %cst_11 = arith.constant 2.000000e+00 : f32
    %42 = vector.broadcast %cst_11 : f32 to vector<2x128xf32>
    %43 = arith.mulf %12, %42 : vector<2x128xf32>
    %cst_12 = arith.constant 0.000000e+00 : f32
    %44 = vector.broadcast %cst_12 : f32 to vector<2x128xf32>
    %45 = arith.select %41, %43, %44 : vector<2x128xi1>, vector<2x128xf32>
    %c0_13 = arith.constant 0 : index
    %c0_14 = arith.constant 0 : index
    %46 = vector.load %arg5[%c0_13, %c0_14] : memref<2x128xf32, #tpu.memory_space<vmem>>, vector<2x128xf32>
    tpu.vector_store %arg5[%c0_13, %c0_14], %45 {strides = array<i32>} : memref<2x128xf32, #tpu.memory_space<vmem>>, vector<2x128xf32>,
    return
  }
  func.func @transform_0(%arg0: i32, %arg1: memref<1xi32, #tpu.memory_space<smem>>) -> (i32, i32, i32) {
    %c0_i32 = arith.constant 0 : i32
    %c0_i32_0 = arith.constant 0 : i32
    %c0_i32_1 = arith.constant 0 : i32
    return %arg0, %c0_i32, %c0_i32_0 : i32, i32, i32
  }
  func.func @transform_1(%arg0: i32, %arg1: memref<1xi32, #tpu.memory_space<smem>>) -> (i32, i32) {
    %c0_i32 = arith.constant 0 : i32
    %c0_i32_0 = arith.constant 0 : i32
    %c0_i32_1 = arith.constant 0 : i32
    return %c0_i32, %c0_i32_0 : i32, i32
  }
  func.func @transform_2(%arg0: i32, %arg1: memref<1xi32, #tpu.memory_space<smem>>) -> (i32, i32) {
    %c0_i32 = arith.constant 0 : i32
    %c0_i32_0 = arith.constant 0 : i32
    %c0_i32_1 = arith.constant 0 : i32
    return %c0_i32, %c0_i32_0 : i32, i32
  }
  func.func @transform_3(%arg0: i32, %arg1: memref<1xi32, #tpu.memory_space<smem>>) -> (i32, i32) {
    %c0_i32 = arith.constant 0 : i32
    %c0_i32_0 = arith.constant 0 : i32
    return %arg0, %c0_i32 : i32, i32
  }
}

module attributes {stable_mosaic.version = 11 : i64} {
  func.func @encoder_head_kernel(%arg0: i32, %arg1: memref<1xi32, #tpu.memory_space<smem>>, %arg2: memref<2x32x64xbf16, #tpu.memory_space<vmem>>, %arg3: memref<32x128xbf16, #tpu.memory_space<vmem>>, %arg4: memref<1x128xf32, #tpu.memory_space<vmem>>, %arg5: memref<2x128xf32, #tpu.memory_space<vmem>>) attributes {dimension_semantics = [#tpu.dimension_semantics<parallel>], iteration_bounds = array<i64: 1>, scalar_prefetch = 1 : i64, scratch_operands = 0 : i64, tpu.core_type = #tpu.core_type<tc>, window_params = [{transform_indices = @transform_0, window_bounds = array<i64: 2, 32, 64>}, {pipeline_mode = #tpu.pipeline_mode<synchronous>, transform_indices = @transform_1, window_bounds = array<i64: 32, 128>}, {pipeline_mode = #tpu.pipeline_mode<synchronous>, transform_indices = @transform_2, window_bounds = array<i64: 1, 128>}, {transform_indices = @transform_3, window_bounds = array<i64: 2, 128>}]} {
    %c0 = arith.constant 0 : index
    %c0_0 = arith.constant 0 : index
    %c0_1 = arith.constant 0 : index
    %0 = vector.load %arg2[%c0, %c0_0, %c0_1] : memref<2x32x64xbf16, #tpu.memory_space<vmem>>, vector<2x32x64xbf16>
    %1 = arith.extf %0 : vector<2x32x64xbf16> to vector<2x32x64xf32>
    %cst = arith.constant dense<0.000000e+00> : vector<2x32xf32>
    %2 = vector.multi_reduction <add>, %1, %cst [2] : vector<2x32x64xf32> to vector<2x32xf32>
    %cst_2 = arith.constant 6.400000e+01 : f32
    %3 = vector.broadcast %cst_2 : f32 to vector<2x32xf32>
    %4 = arith.divf %2, %3 : vector<2x32xf32>
    %5 = arith.truncf %4 : vector<2x32xf32> to vector<2x32xbf16>
    %c0_3 = arith.constant 0 : index
    %c0_4 = arith.constant 0 : index
    %6 = vector.load %arg3[%c0_3, %c0_4] : memref<32x128xbf16, #tpu.memory_space<vmem>>, vector<32x128xbf16>
    %cst_5 = arith.constant dense<0.000000e+00> : vector<2x128xf32>
    %7 = tpu.matmul %5, %6, %cst_5 {dimension_numbers = #tpu.dot_dimension_numbers<[1], [0], [0], [1], [0, 0, 1, 1], [], []>} : vector<2x32xbf16>, vector<32x128xbf16>, vector<2x128xf32> -> vector<2x128xf32>
    %c0_6 = arith.constant 0 : index
    %c0_7 = arith.constant 0 : index
    %8 = vector.load %arg4[%c0_6, %c0_7] : memref<1x128xf32, #tpu.memory_space<vmem>>, vector<1x128xf32>
    %9 = vector.broadcast %8 : vector<1x128xf32> to vector<2x128xf32>
    %10 = arith.addf %7, %9 : vector<2x128xf32>
    %cst_8 = arith.constant 0.000000e+00 : f32
    %11 = vector.broadcast %cst_8 : f32 to vector<2x128xf32>
    %12 = arith.maximumf %10, %11 : vector<2x128xf32>
    %c0_9 = arith.constant 0 : index
    %13 = memref.load %arg1[%c0_9] : memref<1xi32, #tpu.memory_space<smem>>
    %14 = tpu.iota {dimensions = array<i32: 0>} : vector<2x128xi32>
    %15 = tpu.iota {dimensions = array<i32: 1>} : vector<2x128xi32>
    %c128_i32 = arith.constant 128 : i32
    %16 = vector.broadcast %c128_i32 : i32 to vector<2x128xi32>
    %17 = arith.muli %14, %16 : vector<2x128xi32>
    %18 = arith.addi %17, %15 : vector<2x128xi32>
    %c-1640531535_i32 = arith.constant -1640531535 : i32
    %19 = arith.muli %13, %c-1640531535_i32 : i32
    %20 = vector.broadcast %19 : i32 to vector<2x128xi32>
    %21 = arith.addi %18, %20 : vector<2x128xi32>
    %c-2048144777_i32 = arith.constant -2048144777 : i32
    %22 = arith.muli %arg0, %c-2048144777_i32 : i32
    %23 = vector.broadcast %22 : i32 to vector<2x128xi32>
    %24 = arith.addi %21, %23 : vector<2x128xi32>
    %c16_i32 = arith.constant 16 : i32
    %25 = vector.broadcast %c16_i32 : i32 to vector<2x128xi32>
    %26 = arith.shrui %24, %25 : vector<2x128xi32>
    %27 = arith.xori %24, %26 : vector<2x128xi32>
    %c2146121005_i32 = arith.constant 2146121005 : i32
    %28 = vector.broadcast %c2146121005_i32 : i32 to vector<2x128xi32>
    %29 = arith.muli %27, %28 : vector<2x128xi32>
    %c15_i32 = arith.constant 15 : i32
    %30 = vector.broadcast %c15_i32 : i32 to vector<2x128xi32>
    %31 = arith.shrui %29, %30 : vector<2x128xi32>
    %32 = arith.xori %29, %31 : vector<2x128xi32>
    %c-2073254261_i32 = arith.constant -2073254261 : i32
    %33 = vector.broadcast %c-2073254261_i32 : i32 to vector<2x128xi32>
    %34 = arith.muli %32, %33 : vector<2x128xi32>
    %c16_i32_10 = arith.constant 16 : i32
    %35 = vector.broadcast %c16_i32_10 : i32 to vector<2x128xi32>
    %36 = arith.shrui %34, %35 : vector<2x128xi32>
    %37 = arith.xori %34, %36 : vector<2x128xi32>
    %c-2147483648_i32 = arith.constant -2147483648 : i32
    %38 = vector.broadcast %c-2147483648_i32 : i32 to vector<2x128xi32>
    %39 = arith.andi %37, %38 : vector<2x128xi32>
    %c0_i32 = arith.constant 0 : i32
    %40 = vector.broadcast %c0_i32 : i32 to vector<2x128xi32>
    %41 = arith.cmpi ne, %39, %40 : vector<2x128xi32>
    %cst_11 = arith.constant 2.000000e+00 : f32
    %42 = vector.broadcast %cst_11 : f32 to vector<2x128xf32>
    %43 = arith.mulf %12, %42 : vector<2x128xf32>
    %cst_12 = arith.constant 0.000000e+00 : f32
    %44 = vector.broadcast %cst_12 : f32 to vector<2x128xf32>
    %45 = arith.select %41, %43, %44 : vector<2x128xi1>, vector<2x128xf32>
    %c0_13 = arith.constant 0 : index
    %c0_14 = arith.constant 0 : index
    %46 = vector.load %arg5[%c0_13, %c0_14] : memref<2x128xf32, #tpu.memory_space<vmem>>, vector<2x128xf32>
    tpu.vector_store %arg5[%c0_13, %c0_14], %45 {strides = array<i32>} : memref<2x128xf32, #tpu.memory_space<vmem>>, vector<2x128xf32>,
    return
  }
  func.func @transform_0(%arg0: i32, %arg1: memref<1xi32, #tpu.memory_space<smem>>) -> (i32, i32, i32) {
    %c0_i32 = arith.constant 0 : i32
    %c0_i32_0 = arith.constant 0 : i32
    %c0_i32_1 = arith.constant 0 : i32
    return %arg0, %c0_i32, %c0_i32_0 : i32, i32, i32
  }
  func.func @transform_1(%arg0: i32, %arg1: memref<1xi32, #tpu.memory_space<smem>>) -> (i32, i32) {
    %c0_i32 = arith.constant 0 : i32
    %c0_i32_0 = arith.constant 0 : i32
    %c0_i32_1 = arith.constant 0 : i32
    return %c0_i32, %c0_i32_0 : i32, i32
  }
  func.func @transform_2(%arg0: i32, %arg1: memref<1xi32, #tpu.memory_space<smem>>) -> (i32, i32) {
    %c0_i32 = arith.constant 0 : i32
    %c0_i32_0 = arith.constant 0 : i32
    %c0_i32_1 = arith.constant 0 : i32
    return %c0_i32, %c0_i32_0 : i32, i32
  }
  func.func @transform_3(%arg0: i32, %arg1: memref<1xi32, #tpu.memory_space<smem>>) -> (i32, i32) {
    %c0_i32 = arith.constant 0 : i32
    %c0_i32_0 = arith.constant 0 : i32
    return %arg0, %c0_i32 : i32, i32
  }
}

</mosaic_0001>

<llo_original>
// kernel: tpu_custom_call.1
$region0: #{tpu_custom_call.1}
  #allocation0 [shape = 'u32[]', space=smem, size = 0x4, offset = 0x4, fixed_abs, tag = 'smem constant byte address 0x4 - core index']
  #allocation1 [shape = 'u32[144,128]{1,0:T(1,128)}', space=vmem, size = 0x12000, scoped, tag = 'internal scratch']
  #allocation2 [shape = 's32[1]{0}', space=sflag, size = 0x4, scoped, tag = 'scoped memory for tpu_custom_call.1']
  #allocation3 [shape = 's32[1]{0:T(128)S(6)}', space=smem, size = 0x200, scoped, tag = 'prefetched SMEM operand 0']
  %s0 = inlined_call_operand.<no memory space> [shape: s32[1], index: 0, kind: input, shape index: {}]
  %s1 = inlined_call_operand.hbm [shape: bf16[2,32,64], index: 1, kind: input, shape index: {}]
  %s2 = inlined_call_operand.hbm [shape: bf16[32,128], index: 2, kind: input, shape index: {}]
  %s3 = inlined_call_operand.vmem [shape: f32[1,128], index: 3, kind: input, shape index: {}]
  %s4 = inlined_call_operand.hbm [shape: f32[2,128], index: 4, kind: output, shape index: {}]
  %s5 = sld [smem:[#allocation0]]
  $region30: #{tpu_custom_call.1} parent=0
    _
  %s7 = ssub.s32 1, %s5
  %s8 = scalar_select 0, %s7, %s5
  %9 = sst [smem:[#allocation3]] %s0
  $region1: #{tpu_custom_call.1} parent=0
    #allocation4 [shape = 'u8[16384]{0}', space=vmem, size = 0x4000, scoped, tag = 'input window, operand 1, single buffered']
    #allocation5 [shape = 's32[1]{0}', space=sflag, size = 0x4, scoped, tag = 'scoped memory for tpu_custom_call.1']
    #allocation6 [shape = 's32[1]{0}', space=sflag, size = 0x4, scoped, tag = 'scoped memory for tpu_custom_call.1']
    #allocation7 [shape = 'u8[8192]{0}', space=vmem, size = 0x2000, scoped, tag = 'input window, operand 2, single buffered']
    #allocation8 [shape = 's32[1]{0}', space=sflag, size = 0x4, scoped, tag = 'scoped memory for tpu_custom_call.1']
    #allocation9 [shape = 'u8[1024]{0}', space=vmem, size = 0x400, scoped, tag = 'output window, operand 0, single buffered']
    %10 = vsyncpa [#allocation5], 0
    %11 = vsyncpa [#allocation8], 0
    %12 = vsyncpa [#allocation6], 0
    // Predicated region
    $region2: #{tpu_custom_call.1} parent=1 // pred_check
      _
    $region3: #{tpu_custom_call.1} parent=1 // pred_check_branch
      %14 = sbr.rel (0) target = $region5
    $region4: #{tpu_custom_call.1} parent=1 // pred_region
      %s16 = ssub.s32 512, 512
      %17 = vsyncadd [#allocation5], %s16
      %s18 = sshll.u32 [#allocation4], 4
      %s19 = int_to_ptr.vmem [resolvable:$true] %s18
      %24 = dma.hbm_to_vmem [thread:$0]  %s1, 512, %s19, [#allocation5], 64, 64, 4
    $region5: #{tpu_custom_call.1} parent=1 // pred_fallthru
      _
    // Predicated region
    $region6: #{tpu_custom_call.1} parent=1 // pred_check
      _
    $region7: #{tpu_custom_call.1} parent=1 // pred_check_branch
      %26 = sbr.rel (0) target = $region9
    $region8: #{tpu_custom_call.1} parent=1 // pred_region
      %s28 = ssub.s32 256, 256
      %29 = vsyncadd [#allocation8], %s28
      %s30 = sshll.u32 [#allocation7], 4
      %s31 = int_to_ptr.vmem [resolvable:$true] %s30
      %36 = dma.hbm_to_vmem [thread:$0]  %s2, 256, %s31, [#allocation8], 64, 64, 4
    $region9: #{tpu_custom_call.1} parent=1 // pred_fallthru
      _
    // Predicated region
    $region10: #{tpu_custom_call.1} parent=1 // pred_check
      _
    $region11: #{tpu_custom_call.1} parent=1 // pred_check_branch
      %38 = sbr.rel (0) target = $region13
    $region12: #{tpu_custom_call.1} parent=1 // pred_region
      _
    $region13: #{tpu_custom_call.1} parent=1 // pred_fallthru
      _
    // Predicated region
    $region14: #{tpu_custom_call.1} parent=1 // pred_check
      _
    $region15: #{tpu_custom_call.1} parent=1 // pred_check_branch
      %40 = sbr.rel (0) target = $region17
    $region16: #{tpu_custom_call.1} parent=1 // pred_region
      %41 = dma.done [#allocation5], 512
    $region17: #{tpu_custom_call.1} parent=1 // pred_fallthru
      _
    // Predicated region
    $region18: #{tpu_custom_call.1} parent=1 // pred_check
      _
    $region19: #{tpu_custom_call.1} parent=1 // pred_check_branch
      %43 = sbr.rel (0) target = $region21
    $region20: #{tpu_custom_call.1} parent=1 // pred_region
      %44 = dma.done [#allocation8], 256
    $region21: #{tpu_custom_call.1} parent=1 // pred_fallthru
      _
    %v46 = vld [vmem:[#allocation4] sm:$0xf]
    %v47 = vld [vmem:[#allocation4 + $0x4] sm:$0xf]
    %v48 = vld [vmem:[#allocation4 + $0x8] sm:$0xf]
    %v49 = vld [vmem:[#allocation4 + $0xc] sm:$0xf]
    %v50 = vld [vmem:[#allocation4 + $0x10] sm:$0xf]
    %v51 = vld [vmem:[#allocation4 + $0x14] sm:$0xf]
    %v52 = vld [vmem:[#allocation4 + $0x18] sm:$0xf]
    %v53 = vld [vmem:[#allocation4 + $0x1c] sm:$0xf]
    %v54 = vunpack.c.l.bf16 %v46
    %v55 = vunpack.c.l.bf16 %v47
    %v56 = vunpack.c.l.bf16 %v48
    %v57 = vunpack.c.l.bf16 %v49
    %v58 = vunpack.c.l.bf16 %v50
    %v59 = vunpack.c.l.bf16 %v51
    %v60 = vunpack.c.l.bf16 %v52
    %v61 = vunpack.c.l.bf16 %v53
    %vm62 = vcmask 523264
    %v63 = vsel %vm62, %v54, 0.0
    %64 = vadd.xlane.f32.xlu0 %v63
    %v65 = vpop.xlane.xlu0 %64
    %v66 = vsel %vm62, %v55, 0.0
    %67 = vadd.xlane.f32.xlu0 %v66
    %v68 = vpop.xlane.xlu0 %67
    %v69 = vsel %vm62, %v56, 0.0
    %70 = vadd.xlane.f32.xlu0 %v69
    %v71 = vpop.xlane.xlu0 %70
    %v72 = vsel %vm62, %v57, 0.0
    %73 = vadd.xlane.f32.xlu0 %v72
    %v74 = vpop.xlane.xlu0 %73
    %v75 = vsel %vm62, %v58, 0.0
    %76 = vadd.xlane.f32.xlu0 %v75
    %v77 = vpop.xlane.xlu0 %76
    %v78 = vsel %vm62, %v59, 0.0
    %79 = vadd.xlane.f32.xlu0 %v78
    %v80 = vpop.xlane.xlu0 %79
    %v81 = vsel %vm62, %v60, 0.0
    %82 = vadd.xlane.f32.xlu0 %v81
    %v83 = vpop.xlane.xlu0 %82
    %v84 = vsel %vm62, %v61, 0.0
    %85 = vadd.xlane.f32.xlu0 %v84
    %v86 = vpop.xlane.xlu0 %85
    %v87 = vrcp.pop 64.0
    %v88 = vmul.f32 %v65, %v87
    %v89 = vmul.f32 %v68, %v87
    %v90 = vmul.f32 %v71, %v87
    %v91 = vmul.f32 %v74, %v87
    %v92 = vmul.f32 %v77, %v87
    %v93 = vmul.f32 %v80, %v87
    %v94 = vmul.f32 %v83, %v87
    %v95 = vmul.f32 %v86, %v87
    %v96 = vpack.c.bf16 %v89, %v88
    %v97 = vpack.c.bf16 %v91, %v90
    %v98 = vpack.c.bf16 %v93, %v92
    %v99 = vpack.c.bf16 %v95, %v94
    %v100 = vld [vmem:[#allocation7] sm:$0xf]
    %v101 = vld [vmem:[#allocation7 + $0x4] sm:$0xf]
    %v102 = vld [vmem:[#allocation7 + $0x8] sm:$0xf]
    %v103 = vld [vmem:[#allocation7 + $0xc] sm:$0xf]
    %v104 = vld [vmem:[%s3] sm:$0x1]
    %v106 = vlaneseq
    %v107 = vshrl.u32 %v106, 7
    %v108 = vsub.s32 0, %v107
    %v109 = vrot.slane %v104, %v108
    %v115 = vunpack.c.l.b16 %v96
    %v116 = vunpack.c.h.b16 %v96
    %v117 = vunpack.c.l.b16 %v97
    %v118 = vunpack.c.h.b16 %v97
    %v119 = vunpack.c.l.b16 %v98
    %v120 = vunpack.c.h.b16 %v98
    %v121 = vunpack.c.l.b16 %v99
    %v122 = vunpack.c.h.b16 %v99
    %v123 = vlaneseq
    %v124 = vand.u32 %v123, 127
    %v125 = vlaneseq
    %v126 = vshrl.u32 %v125, 7
    %v127 = vsub.s32 %v124, %v126
    %v128 = vrot.slane %v115, %v127
    %v129 = vadd.s32 %v124, 4294967288
    %v130 = vlaneseq
    %v131 = vshrl.u32 %v130, 7
    %v132 = vsub.s32 %v129, %v131
    %v133 = vrot.slane %v116, %v132
    %vm134 = vcmask 130112
    %v135 = vsel %vm134, %v133, %v128
    %v136 = vadd.s32 %v124, 4294967280
    %v137 = vlaneseq
    %v138 = vshrl.u32 %v137, 7
    %v139 = vsub.s32 %v136, %v138
    %v140 = vrot.slane %v117, %v139
    %vm141 = vcmask 195712
    %v142 = vsel %vm141, %v140, %v135
    %v143 = vadd.s32 %v124, 4294967272
    %v144 = vlaneseq
    %v145 = vshrl.u32 %v144, 7
    %v146 = vsub.s32 %v143, %v145
    %v147 = vrot.slane %v118, %v146
    %vm148 = vcmask 261312
    %v149 = vsel %vm148, %v147, %v142
    %v150 = vlaneseq
    %v151 = vshrl.u32 %v150, 7
    %v152 = vsub.s32 %v124, %v151
    %v153 = vrot.slane %v119, %v152
    %v154 = vlaneseq
    %v155 = vshrl.u32 %v154, 7
    %v156 = vsub.s32 %v129, %v155
    %v157 = vrot.slane %v120, %v156
    %v158 = vsel %vm134, %v157, %v153
    %v159 = vlaneseq
    %v160 = vshrl.u32 %v159, 7
    %v161 = vsub.s32 %v136, %v160
    %v162 = vrot.slane %v121, %v161
    %v163 = vsel %vm141, %v162, %v158
    %v164 = vlaneseq
    %v165 = vshrl.u32 %v164, 7
    %v166 = vsub.s32 %v143, %v165
    %v167 = vrot.slane %v122, %v166
    %v168 = vsel %vm148, %v167, %v163
    %vm169 = vcmask 1041409
    %v170 = vsel %vm169, %v168, %v149
    %v171 = vpack.c.b16 %v170, %v170
    %v176 = vunpack.c.l.b16 %v100
    %v177 = vunpack.c.l.b16 %v101
    %v178 = vunpack.c.l.b16 %v102
    %v179 = vunpack.c.l.b16 %v103
    %v180 = vpack.c.b16 %v177, %v176
    %v181 = vpack.c.b16 %v179, %v178
    %vm184 = vcmask 261120
    %v186 = vsel %vm184, %v171, 0
    %188 = vmatprep.subr.bf16.mxu0 0
    %189 = vmatpush1.bf16.msra.mxu0 0
    %190 = vmatprep.subr.bf16.mxu0 0
    %191 = vmatpush1.bf16.msra.mxu0 0
    %192 = vmatprep.subr.bf16.mxu0 0
    %193 = vmatpush1.bf16.msra.mxu0 0
    %194 = vmatprep.subr.bf16.mxu0 0
    %195 = vmatpush1.bf16.msra.mxu0 0
    %196 = vmatprep.subr.bf16.mxu0 0
    %197 = vmatpush1.bf16.msra.mxu0 0
    %198 = vmatprep.subr.bf16.mxu0 0
    %199 = vmatpush1.bf16.msra.mxu0 0
    %200 = vmatprep.subr.bf16.mxu0 0
    %201 = vmatpush1.bf16.msra.mxu0 %v181
    %202 = vmatprep.subr.bf16.mxu0 0
    %203 = vmatpush1.bf16.msra.mxu0 %v180
    %204 = vmatprep.subr.bf16.mxu0 0
    %205 = vmatpush2.bf16.msra.mxu0 0
    %206 = vmatprep.subr.bf16.mxu0 0
    %207 = vmatpush2.bf16.msra.mxu0 0
    %208 = vmatprep.subr.bf16.mxu0 0
    %209 = vmatpush2.bf16.msra.mxu0 0
    %210 = vmatprep.subr.bf16.mxu0 0
    %211 = vmatpush2.bf16.msra.mxu0 0
    %212 = vmatprep.subr.bf16.mxu0 0
    %213 = vmatpush2.bf16.msra.mxu0 0
    %214 = vmatprep.subr.bf16.mxu0 0
    %215 = vmatpush2.bf16.msra.mxu0 0
    %216 = vmatprep.subr.bf16.mxu0 0
    %217 = vmatpush2.bf16.msra.mxu0 0
    %218 = vmatprep.subr.bf16.mxu0 0
    %219 = vmatpush2.bf16.msra.mxu0 0
    %220 = vmatprep.mubr.bf16.mxu0 0
    %221 = vmatmul.mubr.bf16.gmra.mxu0 %v186
    %v222 = vpop.f32.mrf.mxu0
    %v223 = vadd.f32 %v109, %v222
    %v224 = vpop.f32.mrf.mxu0
    %v225 = vpop.f32.mrf.mxu0
    %v226 = vpop.f32.mrf.mxu0
    %227 = vdwg.mxu0
    %v228 = vmax.f32 %v223, 0.0
    %s229 = sld [smem:[#allocation3]]
    %v230 = vlaneseq
    %v231 = vshrl.u32 %v230, 7
    %v232 = vmul.u32 %v231, 128
    %v233 = vadd.s32 %v232, %v124
    %s234 = smul.u32 %s229, 2654435761
    %v235 = vstv %s234
    %v236 = vadd.s32 %v233, %v235
    %s237 = smul.u32 0, 2246822519
    %v238 = vstv %s237
    %v239 = vadd.s32 %v236, %v238
    %v240 = vshrl.u32 %v239, 16
    %v241 = vxor.u32 %v239, %v240
    %v242 = vmul.u32 %v241, 2146121005
    %v243 = vshrl.u32 %v242, 15
    %v244 = vxor.u32 %v242, %v243
    %v245 = vmul.u32 %v244, 2221713035
    %v246 = vshrl.u32 %v245, 16
    %v247 = vxor.u32 %v245, %v246
    %v248 = vand.u32 %v247, 2147483648
    %vm249 = vcmp.ne.s32.totalorder %v248, 0
    %v250 = vmul.f32 %v228, 2.0
    %v251 = vsel %vm249, %v250, 0.0
    %252 = vst [vmem:[#allocation9] sm:$0x3] %v251
    // Predicated region
    $region22: #{tpu_custom_call.1} parent=1 // pred_check
      _
    $region23: #{tpu_custom_call.1} parent=1 // pred_check_branch
      %254 = sbr.rel (0) target = $region25
    $region24: #{tpu_custom_call.1} parent=1 // pred_region
      %s256 = ssub.s32 32, 32
      %257 = vsyncadd [#allocation6], %s256
      %s259 = sshll.u32 [#allocation9], 4
      %s260 = int_to_ptr.vmem [resolvable:$true] %s259
      %262 = dma.vmem_to_hbm [thread:$0]  %s260, 32, %s4, [#allocation6]
    $region25: #{tpu_custom_call.1} parent=1 // pred_fallthru
      _
    // Predicated region
    $region26: #{tpu_custom_call.1} parent=1 // pred_check
      _
    $region27: #{tpu_custom_call.1} parent=1 // pred_check_branch
      %264 = sbr.rel (0) target = $region29
    $region28: #{tpu_custom_call.1} parent=1 // pred_region
      %265 = dma.done [#allocation6], 32
    $region29: #{tpu_custom_call.1} parent=1 // pred_fallthru
      _
    %266 = vsyncpa [#allocation5], 1
    %267 = vsyncpa [#allocation8], 1
    %268 = vsyncpa [#allocation6], 1

// kernel: tpu_custom_call.1
$region0: #{tpu_custom_call.1}
  #allocation0 [shape = 'u32[]', space=smem, size = 0x4, offset = 0x4, fixed_abs, tag = 'smem constant byte address 0x4 - core index']
  #allocation1 [shape = 'u32[144,128]{1,0:T(1,128)}', space=vmem, size = 0x12000, scoped, tag = 'internal scratch']
  #allocation2 [shape = 's32[1]{0}', space=sflag, size = 0x4, scoped, tag = 'scoped memory for tpu_custom_call.1']
  #allocation3 [shape = 's32[1]{0:T(128)S(6)}', space=smem, size = 0x200, scoped, tag = 'prefetched SMEM operand 0']
  %s0 = inlined_call_operand.<no memory space> [shape: s32[1], index: 0, kind: input, shape index: {}]
  %s1 = inlined_call_operand.hbm [shape: bf16[2,32,64], index: 1, kind: input, shape index: {}]
  %s2 = inlined_call_operand.hbm [shape: bf16[32,128], index: 2, kind: input, shape index: {}]
  %s3 = inlined_call_operand.vmem [shape: f32[1,128], index: 3, kind: input, shape index: {}]
  %s4 = inlined_call_operand.hbm [shape: f32[2,128], index: 4, kind: output, shape index: {}]
  %s5 = sld [smem:[#allocation0]]
  $region30: #{tpu_custom_call.1} parent=0
    _
  %s7 = ssub.s32 1, %s5
  %s8 = scalar_select 0, %s7, %s5
  %9 = sst [smem:[#allocation3]] %s0
  $region1: #{tpu_custom_call.1} parent=0
    #allocation4 [shape = 'u8[16384]{0}', space=vmem, size = 0x4000, scoped, tag = 'input window, operand 1, single buffered']
    #allocation5 [shape = 's32[1]{0}', space=sflag, size = 0x4, scoped, tag = 'scoped memory for tpu_custom_call.1']
    #allocation6 [shape = 's32[1]{0}', space=sflag, size = 0x4, scoped, tag = 'scoped memory for tpu_custom_call.1']
    #allocation7 [shape = 'u8[8192]{0}', space=vmem, size = 0x2000, scoped, tag = 'input window, operand 2, single buffered']
    #allocation8 [shape = 's32[1]{0}', space=sflag, size = 0x4, scoped, tag = 'scoped memory for tpu_custom_call.1']
    #allocation9 [shape = 'u8[1024]{0}', space=vmem, size = 0x400, scoped, tag = 'output window, operand 0, single buffered']
    %10 = vsyncpa [#allocation5], 0
    %11 = vsyncpa [#allocation8], 0
    %12 = vsyncpa [#allocation6], 0
    // Predicated region
    $region2: #{tpu_custom_call.1} parent=1 // pred_check
      _
    $region3: #{tpu_custom_call.1} parent=1 // pred_check_branch
      %14 = sbr.rel (0) target = $region5
    $region4: #{tpu_custom_call.1} parent=1 // pred_region
      %s16 = ssub.s32 512, 512
      %17 = vsyncadd [#allocation5], %s16
      %s18 = sshll.u32 [#allocation4], 4
      %s19 = int_to_ptr.vmem [resolvable:$true] %s18
      %24 = dma.hbm_to_vmem [thread:$0]  %s1, 512, %s19, [#allocation5], 64, 64, 4
    $region5: #{tpu_custom_call.1} parent=1 // pred_fallthru
      _
    // Predicated region
    $region6: #{tpu_custom_call.1} parent=1 // pred_check
      _
    $region7: #{tpu_custom_call.1} parent=1 // pred_check_branch
      %26 = sbr.rel (0) target = $region9
    $region8: #{tpu_custom_call.1} parent=1 // pred_region
      %s28 = ssub.s32 256, 256
      %29 = vsyncadd [#allocation8], %s28
      %s30 = sshll.u32 [#allocation7], 4
      %s31 = int_to_ptr.vmem [resolvable:$true] %s30
      %36 = dma.hbm_to_vmem [thread:$0]  %s2, 256, %s31, [#allocation8], 64, 64, 4
    $region9: #{tpu_custom_call.1} parent=1 // pred_fallthru
      _
    // Predicated region
    $region10: #{tpu_custom_call.1} parent=1 // pred_check
      _
    $region11: #{tpu_custom_call.1} parent=1 // pred_check_branch
      %38 = sbr.rel (0) target = $region13
    $region12: #{tpu_custom_call.1} parent=1 // pred_region
      _
    $region13: #{tpu_custom_call.1} parent=1 // pred_fallthru
      _
    // Predicated region
    $region14: #{tpu_custom_call.1} parent=1 // pred_check
      _
    $region15: #{tpu_custom_call.1} parent=1 // pred_check_branch
      %40 = sbr.rel (0) target = $region17
    $region16: #{tpu_custom_call.1} parent=1 // pred_region
      %41 = dma.done [#allocation5], 512
    $region17: #{tpu_custom_call.1} parent=1 // pred_fallthru
      _
    // Predicated region
    $region18: #{tpu_custom_call.1} parent=1 // pred_check
      _
    $region19: #{tpu_custom_call.1} parent=1 // pred_check_branch
      %43 = sbr.rel (0) target = $region21
    $region20: #{tpu_custom_call.1} parent=1 // pred_region
      %44 = dma.done [#allocation8], 256
    $region21: #{tpu_custom_call.1} parent=1 // pred_fallthru
      _
    %v46 = vld [vmem:[#allocation4] sm:$0xf]
    %v47 = vld [vmem:[#allocation4 + $0x4] sm:$0xf]
    %v48 = vld [vmem:[#allocation4 + $0x8] sm:$0xf]
    %v49 = vld [vmem:[#allocation4 + $0xc] sm:$0xf]
    %v50 = vld [vmem:[#allocation4 + $0x10] sm:$0xf]
    %v51 = vld [vmem:[#allocation4 + $0x14] sm:$0xf]
    %v52 = vld [vmem:[#allocation4 + $0x18] sm:$0xf]
    %v53 = vld [vmem:[#allocation4 + $0x1c] sm:$0xf]
    %v54 = vunpack.c.l.bf16 %v46
    %v55 = vunpack.c.l.bf16 %v47
    %v56 = vunpack.c.l.bf16 %v48
    %v57 = vunpack.c.l.bf16 %v49
    %v58 = vunpack.c.l.bf16 %v50
    %v59 = vunpack.c.l.bf16 %v51
    %v60 = vunpack.c.l.bf16 %v52
    %v61 = vunpack.c.l.bf16 %v53
    %vm62 = vcmask 523264
    %v63 = vsel %vm62, %v54, 0.0
    %64 = vadd.xlane.f32.xlu0 %v63
    %v65 = vpop.xlane.xlu0 %64
    %v66 = vsel %vm62, %v55, 0.0
    %67 = vadd.xlane.f32.xlu0 %v66
    %v68 = vpop.xlane.xlu0 %67
    %v69 = vsel %vm62, %v56, 0.0
    %70 = vadd.xlane.f32.xlu0 %v69
    %v71 = vpop.xlane.xlu0 %70
    %v72 = vsel %vm62, %v57, 0.0
    %73 = vadd.xlane.f32.xlu0 %v72
    %v74 = vpop.xlane.xlu0 %73
    %v75 = vsel %vm62, %v58, 0.0
    %76 = vadd.xlane.f32.xlu0 %v75
    %v77 = vpop.xlane.xlu0 %76
    %v78 = vsel %vm62, %v59, 0.0
    %79 = vadd.xlane.f32.xlu0 %v78
    %v80 = vpop.xlane.xlu0 %79
    %v81 = vsel %vm62, %v60, 0.0
    %82 = vadd.xlane.f32.xlu0 %v81
    %v83 = vpop.xlane.xlu0 %82
    %v84 = vsel %vm62, %v61, 0.0
    %85 = vadd.xlane.f32.xlu0 %v84
    %v86 = vpop.xlane.xlu0 %85
    %v87 = vrcp.pop 64.0
    %v88 = vmul.f32 %v65, %v87
    %v89 = vmul.f32 %v68, %v87
    %v90 = vmul.f32 %v71, %v87
    %v91 = vmul.f32 %v74, %v87
    %v92 = vmul.f32 %v77, %v87
    %v93 = vmul.f32 %v80, %v87
    %v94 = vmul.f32 %v83, %v87
    %v95 = vmul.f32 %v86, %v87
    %v96 = vpack.c.bf16 %v89, %v88
    %v97 = vpack.c.bf16 %v91, %v90
    %v98 = vpack.c.bf16 %v93, %v92
    %v99 = vpack.c.bf16 %v95, %v94
    %v100 = vld [vmem:[#allocation7] sm:$0xf]
    %v101 = vld [vmem:[#allocation7 + $0x4] sm:$0xf]
    %v102 = vld [vmem:[#allocation7 + $0x8] sm:$0xf]
    %v103 = vld [vmem:[#allocation7 + $0xc] sm:$0xf]
    %v104 = vld [vmem:[%s3] sm:$0x1]
    %v106 = vlaneseq
    %v107 = vshrl.u32 %v106, 7
    %v108 = vsub.s32 0, %v107
    %v109 = vrot.slane %v104, %v108
    %v115 = vunpack.c.l.b16 %v96
    %v116 = vunpack.c.h.b16 %v96
    %v117 = vunpack.c.l.b16 %v97
    %v118 = vunpack.c.h.b16 %v97
    %v119 = vunpack.c.l.b16 %v98
    %v120 = vunpack.c.h.b16 %v98
    %v121 = vunpack.c.l.b16 %v99
    %v122 = vunpack.c.h.b16 %v99
    %v123 = vlaneseq
    %v124 = vand.u32 %v123, 127
    %v125 = vlaneseq
    %v126 = vshrl.u32 %v125, 7
    %v127 = vsub.s32 %v124, %v126
    %v128 = vrot.slane %v115, %v127
    %v129 = vadd.s32 %v124, 4294967288
    %v130 = vlaneseq
    %v131 = vshrl.u32 %v130, 7
    %v132 = vsub.s32 %v129, %v131
    %v133 = vrot.slane %v116, %v132
    %vm134 = vcmask 130112
    %v135 = vsel %vm134, %v133, %v128
    %v136 = vadd.s32 %v124, 4294967280
    %v137 = vlaneseq
    %v138 = vshrl.u32 %v137, 7
    %v139 = vsub.s32 %v136, %v138
    %v140 = vrot.slane %v117, %v139
    %vm141 = vcmask 195712
    %v142 = vsel %vm141, %v140, %v135
    %v143 = vadd.s32 %v124, 4294967272
    %v144 = vlaneseq
    %v145 = vshrl.u32 %v144, 7
    %v146 = vsub.s32 %v143, %v145
    %v147 = vrot.slane %v118, %v146
    %vm148 = vcmask 261312
    %v149 = vsel %vm148, %v147, %v142
    %v150 = vlaneseq
    %v151 = vshrl.u32 %v150, 7
    %v152 = vsub.s32 %v124, %v151
    %v153 = vrot.slane %v119, %v152
    %v154 = vlaneseq
    %v155 = vshrl.u32 %v154, 7
    %v156 = vsub.s32 %v129, %v155
    %v157 = vrot.slane %v120, %v156
    %v158 = vsel %vm134, %v157, %v153
    %v159 = vlaneseq
    %v160 = vshrl.u32 %v159, 7
    %v161 = vsub.s32 %v136, %v160
    %v162 = vrot.slane %v121, %v161
    %v163 = vsel %vm141, %v162, %v158
    %v164 = vlaneseq
    %v165 = vshrl.u32 %v164, 7
    %v166 = vsub.s32 %v143, %v165
    %v167 = vrot.slane %v122, %v166
    %v168 = vsel %vm148, %v167, %v163
    %vm169 = vcmask 1041409
    %v170 = vsel %vm169, %v168, %v149
    %v171 = vpack.c.b16 %v170, %v170
    %v176 = vunpack.c.l.b16 %v100
    %v177 = vunpack.c.l.b16 %v101
    %v178 = vunpack.c.l.b16 %v102
    %v179 = vunpack.c.l.b16 %v103
    %v180 = vpack.c.b16 %v177, %v176
    %v181 = vpack.c.b16 %v179, %v178
    %vm184 = vcmask 261120
    %v186 = vsel %vm184, %v171, 0
    %188 = vmatprep.subr.bf16.mxu0 0
    %189 = vmatpush1.bf16.msra.mxu0 0
    %190 = vmatprep.subr.bf16.mxu0 0
    %191 = vmatpush1.bf16.msra.mxu0 0
    %192 = vmatprep.subr.bf16.mxu0 0
    %193 = vmatpush1.bf16.msra.mxu0 0
    %194 = vmatprep.subr.bf16.mxu0 0
    %195 = vmatpush1.bf16.msra.mxu0 0
    %196 = vmatprep.subr.bf16.mxu0 0
    %197 = vmatpush1.bf16.msra.mxu0 0
    %198 = vmatprep.subr.bf16.mxu0 0
    %199 = vmatpush1.bf16.msra.mxu0 0
    %200 = vmatprep.subr.bf16.mxu0 0
    %201 = vmatpush1.bf16.msra.mxu0 %v181
    %202 = vmatprep.subr.bf16.mxu0 0
    %203 = vmatpush1.bf16.msra.mxu0 %v180
    %204 = vmatprep.subr.bf16.mxu0 0
    %205 = vmatpush2.bf16.msra.mxu0 0
    %206 = vmatprep.subr.bf16.mxu0 0
    %207 = vmatpush2.bf16.msra.mxu0 0
    %208 = vmatprep.subr.bf16.mxu0 0
    %209 = vmatpush2.bf16.msra.mxu0 0
    %210 = vmatprep.subr.bf16.mxu0 0
    %211 = vmatpush2.bf16.msra.mxu0 0
    %212 = vmatprep.subr.bf16.mxu0 0
    %213 = vmatpush2.bf16.msra.mxu0 0
    %214 = vmatprep.subr.bf16.mxu0 0
    %215 = vmatpush2.bf16.msra.mxu0 0
    %216 = vmatprep.subr.bf16.mxu0 0
    %217 = vmatpush2.bf16.msra.mxu0 0
    %218 = vmatprep.subr.bf16.mxu0 0
    %219 = vmatpush2.bf16.msra.mxu0 0
    %220 = vmatprep.mubr.bf16.mxu0 0
    %221 = vmatmul.mubr.bf16.gmra.mxu0 %v186
    %v222 = vpop.f32.mrf.mxu0
    %v223 = vadd.f32 %v109, %v222
    %v224 = vpop.f32.mrf.mxu0
    %v225 = vpop.f32.mrf.mxu0
    %v226 = vpop.f32.mrf.mxu0
    %227 = vdwg.mxu0
    %v228 = vmax.f32 %v223, 0.0
    %s229 = sld [smem:[#allocation3]]
    %v230 = vlaneseq
    %v231 = vshrl.u32 %v230, 7
    %v232 = vmul.u32 %v231, 128
    %v233 = vadd.s32 %v232, %v124
    %s234 = smul.u32 %s229, 2654435761
    %v235 = vstv %s234
    %v236 = vadd.s32 %v233, %v235
    %s237 = smul.u32 0, 2246822519
    %v238 = vstv %s237
    %v239 = vadd.s32 %v236, %v238
    %v240 = vshrl.u32 %v239, 16
    %v241 = vxor.u32 %v239, %v240
    %v242 = vmul.u32 %v241, 2146121005
    %v243 = vshrl.u32 %v242, 15
    %v244 = vxor.u32 %v242, %v243
    %v245 = vmul.u32 %v244, 2221713035
    %v246 = vshrl.u32 %v245, 16
    %v247 = vxor.u32 %v245, %v246
    %v248 = vand.u32 %v247, 2147483648
    %vm249 = vcmp.ne.s32.totalorder %v248, 0
    %v250 = vmul.f32 %v228, 2.0
    %v251 = vsel %vm249, %v250, 0.0
    %252 = vst [vmem:[#allocation9] sm:$0x3] %v251
    // Predicated region
    $region22: #{tpu_custom_call.1} parent=1 // pred_check
      _
    $region23: #{tpu_custom_call.1} parent=1 // pred_check_branch
      %254 = sbr.rel (0) target = $region25
    $region24: #{tpu_custom_call.1} parent=1 // pred_region
      %s256 = ssub.s32 32, 32
      %257 = vsyncadd [#allocation6], %s256
      %s259 = sshll.u32 [#allocation9], 4
      %s260 = int_to_ptr.vmem [resolvable:$true] %s259
      %262 = dma.vmem_to_hbm [thread:$0]  %s260, 32, %s4, [#allocation6]
    $region25: #{tpu_custom_call.1} parent=1 // pred_fallthru
      _
    // Predicated region
    $region26: #{tpu_custom_call.1} parent=1 // pred_check
      _
    $region27: #{tpu_custom_call.1} parent=1 // pred_check_branch
      %264 = sbr.rel (0) target = $region29
    $region28: #{tpu_custom_call.1} parent=1 // pred_region
      %265 = dma.done [#allocation6], 32
    $region29: #{tpu_custom_call.1} parent=1 // pred_fallthru
      _
    %266 = vsyncpa [#allocation5], 1
    %267 = vsyncpa [#allocation8], 1
    %268 = vsyncpa [#allocation6], 1

</llo_original>
